<compile_context>
chip_gen: v7x
topology: tpu7x:2x2x1
jax: 0.10.0
libtpu: 0.0.40
codegen_flags: <defaults>
</compile_context>

<pallas_src>
import jax
import jax.numpy as jnp
from jax.experimental import pallas as pl
from jax.experimental.pallas import tpu as pltpu


def _round_up(x, m):
    return (x + m - 1) // m * m


def _round_down_mult(x, m):
    return max(m, x // m * m)


def highway_kernel(x_ref, wh_ref, bh_ref, wt_ref, bt_ref, o_ref):
    x = x_ref[...]                                    # (tm, D), native dtype
    # MXU matmuls in the operands' native dtype, f32 accumulation.
    h = jnp.dot(x, wh_ref[...], preferred_element_type=jnp.float32)
    h = jnp.maximum(h + bh_ref[...].astype(jnp.float32), 0.0)
    t = jnp.dot(x, wt_ref[...], preferred_element_type=jnp.float32)
    t = jax.nn.sigmoid(t + bt_ref[...].astype(jnp.float32))
    # Highway gate: h*t + x*(1-t) == x + t*(h - x); elementwise math in f32.
    x32 = x.astype(jnp.float32)
    o_ref[...] = (x32 + t * (h - x32)).astype(o_ref.dtype)


def _vmem_budget_bytes():
    cap = None
    try:
        info = pltpu.get_tpu_info()
        cap = getattr(info, "vmem_capacity_bytes", None)
    except Exception:
        cap = None
    if not cap:
        cap = 64 * 1024 * 1024          # conservative fallback (v7x physical)
    return int(cap) - 8 * 1024 * 1024   # headroom for compiler-internal scratch


def _vmem_estimate(tm, D, x_item, w_item):
    return (4 * tm * D * x_item               # x + out tiles, double-buffered
            + 2 * D * D * w_item              # Wh + Wt, resident single-buffered
            + 2 * _round_up(D, 128) * 4 * 8   # biases (lane/sublane padded)
            + 4 * tm * D * 4)                 # f32 temporaries (h, t, x32, gate)


def highway(x, wh, bh, wt, bt):
    """x: (..., D). wh/wt: (D, D) pre-transposed (in, out). bh/bt: (D,)."""
    orig_shape = x.shape
    D = orig_shape[-1]
    x2 = x.reshape(-1, D)                     # metadata-only, no HBM copy
    N = x2.shape[0]

    x_item = jnp.dtype(x.dtype).itemsize
    w_item = jnp.dtype(wh.dtype).itemsize

    # Row tile: target ~1 MiB x tiles, multiple of 8 sublanes.
    tm = max(512, (1 << 20) // max(1, D * x_item))
    tm = _round_down_mult(tm, 8)
    # Guarantee >= 2 grid steps when possible (v7x: both TCs get work, the
    # pipeline has >= 2 stages).
    if N > 8 and pl.cdiv(N, tm) < 2:
        tm = _round_up(pl.cdiv(N, 2), 8)
    if N <= 8:
        tm = 8
    # Respect the VMEM budget (weights stay resident; shrink row tile if needed).
    budget = _vmem_budget_bytes()
    while tm > 8 and _vmem_estimate(tm, D, x_item, w_item) > budget:
        tm = _round_down_mult(tm // 2, 8)
    # TODO(synk): for very large D (f32 D >~ 1300 on v7x) the resident Wh/Wt no
    # longer fit in VMEM; that regime needs a second grid axis over
    # output-feature tiles streaming (D, tn) weight slices.

    grid = (pl.cdiv(N, tm),)

    bh2 = bh.reshape(1, D)
    bt2 = bt.reshape(1, D)

    est = _vmem_estimate(tm, D, x_item, w_item)
    vmem_limit = int(min(budget, max(32 * 1024 * 1024, int(est * 1.5))))

    out = pl.pallas_call(
        highway_kernel,
        out_shape=jax.ShapeDtypeStruct((N, D), x.dtype),
        grid_spec=pltpu.PrefetchScalarGridSpec(
            num_scalar_prefetch=0,
            grid=grid,
            in_specs=[
                pl.BlockSpec((tm, D), lambda i: (i, 0)),           # x row tile
                pl.BlockSpec((D, D), lambda i: (0, 0),
                             pipeline_mode=pl.Buffered(1)),        # Wh (resident)
                pl.BlockSpec((1, D), lambda i: (0, 0),
                             pipeline_mode=pl.Buffered(1)),        # bh
                pl.BlockSpec((D, D), lambda i: (0, 0),
                             pipeline_mode=pl.Buffered(1)),        # Wt (resident)
                pl.BlockSpec((1, D), lambda i: (0, 0),
                             pipeline_mode=pl.Buffered(1)),        # bt
            ],
            out_specs=pl.BlockSpec((tm, D), lambda i: (i, 0)),
        ),
        compiler_params=pltpu.CompilerParams(
            dimension_semantics=("parallel",),   # rows independent -> megacore
            vmem_limit_bytes=vmem_limit,
        ),
    )(x2, wh, bh2, wt, bt2)

    return out.reshape(orig_shape)


def reference(x, wh, bh, wt, bt):
    h = jax.nn.relu(x @ wh + bh)
    t = jax.nn.sigmoid(x @ wt + bt)
    return h * t + x * (1.0 - t)


if __name__ == "__main__":
    key = jax.random.PRNGKey(0)
    batch, seq, hidden = 2, 8, 32            # in_size == out_size == hidden
    k_x, k_wh, k_wt = jax.random.split(key, 3)

    x = jax.random.normal(k_x, (batch, seq, hidden), dtype=jnp.float32)

    # nn.Linear weights are (out, in); stored pre-transposed as (in, out).
    bound = 1.0 / (hidden ** 0.5)
    wh = jax.random.uniform(k_wh, (hidden, hidden), jnp.float32, -bound, bound)
    wt = jax.random.uniform(k_wt, (hidden, hidden), jnp.float32, -bound, bound)
    bh = jnp.zeros((hidden,), jnp.float32)               # H.bias.data.zero_()
    bt = jnp.full((hidden,), -1.0, jnp.float32)          # T.bias.data.fill_(-1)

    out = highway(x, wh, bh, wt, bt)
    out = jax.block_until_ready(out)

    ref = reference(x, wh, bh, wt, bt)
    assert out.shape == x.shape
    assert jnp.allclose(out, ref, atol=1e-5, rtol=1e-5), "mismatch vs reference"

    print("KERNEL_OK")
</pallas_src>

<mosaic_0001>
module attributes {stable_mosaic.version = 11 : i64} {
  func.func @highway_kernel(%arg0: i32, %arg1: memref<8x32xf32, #tpu.memory_space<vmem>>, %arg2: memref<32x32xf32, #tpu.memory_space<vmem>>, %arg3: memref<1x32xf32, #tpu.memory_space<vmem>>, %arg4: memref<32x32xf32, #tpu.memory_space<vmem>>, %arg5: memref<1x32xf32, #tpu.memory_space<vmem>>, %arg6: memref<8x32xf32, #tpu.memory_space<vmem>>) attributes {dimension_semantics = [#tpu.dimension_semantics<parallel>], iteration_bounds = array<i64: 2>, scalar_prefetch = 0 : i64, scratch_operands = 0 : i64, tpu.core_type = #tpu.core_type<tc>, window_params = [{transform_indices = @transform_0, window_bounds = array<i64: 8, 32>}, {pipeline_mode = #tpu.pipeline_mode<synchronous>, transform_indices = @transform_1, window_bounds = array<i64: 32, 32>}, {pipeline_mode = #tpu.pipeline_mode<synchronous>, transform_indices = @transform_2, window_bounds = array<i64: 1, 32>}, {pipeline_mode = #tpu.pipeline_mode<synchronous>, transform_indices = @transform_3, window_bounds = array<i64: 32, 32>}, {pipeline_mode = #tpu.pipeline_mode<synchronous>, transform_indices = @transform_4, window_bounds = array<i64: 1, 32>}, {transform_indices = @transform_5, window_bounds = array<i64: 8, 32>}]} {
    %c0 = arith.constant 0 : index
    %c0_0 = arith.constant 0 : index
    %0 = vector.load %arg1[%c0, %c0_0] : memref<8x32xf32, #tpu.memory_space<vmem>>, vector<8x32xf32>
    %c0_1 = arith.constant 0 : index
    %c0_2 = arith.constant 0 : index
    %1 = vector.load %arg2[%c0_1, %c0_2] : memref<32x32xf32, #tpu.memory_space<vmem>>, vector<32x32xf32>
    %cst = arith.constant dense<0.000000e+00> : vector<8x32xf32>
    %2 = tpu.matmul %0, %1, %cst {dimension_numbers = #tpu.dot_dimension_numbers<[1], [0], [0], [1], [0, 0, 1, 1], [], []>} : vector<8x32xf32>, vector<32x32xf32>, vector<8x32xf32> -> vector<8x32xf32>
    %c0_3 = arith.constant 0 : index
    %c0_4 = arith.constant 0 : index
    %3 = vector.load %arg3[%c0_3, %c0_4] : memref<1x32xf32, #tpu.memory_space<vmem>>, vector<1x32xf32>
    %4 = vector.broadcast %3 : vector<1x32xf32> to vector<8x32xf32>
    %5 = arith.addf %2, %4 : vector<8x32xf32>
    %cst_5 = arith.constant 0.000000e+00 : f32
    %6 = vector.broadcast %cst_5 : f32 to vector<8x32xf32>
    %7 = arith.maximumf %5, %6 : vector<8x32xf32>
    %c0_6 = arith.constant 0 : index
    %c0_7 = arith.constant 0 : index
    %8 = vector.load %arg4[%c0_6, %c0_7] : memref<32x32xf32, #tpu.memory_space<vmem>>, vector<32x32xf32>
    %cst_8 = arith.constant dense<0.000000e+00> : vector<8x32xf32>
    %9 = tpu.matmul %0, %8, %cst_8 {dimension_numbers = #tpu.dot_dimension_numbers<[1], [0], [0], [1], [0, 0, 1, 1], [], []>} : vector<8x32xf32>, vector<32x32xf32>, vector<8x32xf32> -> vector<8x32xf32>
    %c0_9 = arith.constant 0 : index
    %c0_10 = arith.constant 0 : index
    %10 = vector.load %arg5[%c0_9, %c0_10] : memref<1x32xf32, #tpu.memory_space<vmem>>, vector<1x32xf32>
    %11 = vector.broadcast %10 : vector<1x32xf32> to vector<8x32xf32>
    %12 = arith.addf %9, %11 : vector<8x32xf32>
    %13 = arith.negf %12 : vector<8x32xf32>
    %14 = math.exp %13 : vector<8x32xf32>
    %cst_11 = arith.constant 1.000000e+00 : f32
    %15 = vector.broadcast %cst_11 : f32 to vector<8x32xf32>
    %16 = arith.addf %15, %14 : vector<8x32xf32>
    %17 = arith.divf %15, %16 : vector<8x32xf32>
    %18 = arith.subf %7, %0 : vector<8x32xf32>
    %19 = arith.mulf %17, %18 : vector<8x32xf32>
    %20 = arith.addf %0, %19 : vector<8x32xf32>
    %c0_12 = arith.constant 0 : index
    %c0_13 = arith.constant 0 : index
    %21 = vector.load %arg6[%c0_12, %c0_13] : memref<8x32xf32, #tpu.memory_space<vmem>>, vector<8x32xf32>
    tpu.vector_store %arg6[%c0_12, %c0_13], %20 {strides = array<i32>} : memref<8x32xf32, #tpu.memory_space<vmem>>, vector<8x32xf32>,
    return
  }
  func.func @transform_0(%arg0: i32) -> (i32, i32) {
    %c0_i32 = arith.constant 0 : i32
    %c0_i32_0 = arith.constant 0 : i32
    return %arg0, %c0_i32 : i32, i32
  }
  func.func @transform_1(%arg0: i32) -> (i32, i32) {
    %c0_i32 = arith.constant 0 : i32
    %c0_i32_0 = arith.constant 0 : i32
    %c0_i32_1 = arith.constant 0 : i32
    return %c0_i32, %c0_i32_0 : i32, i32
  }
  func.func @transform_2(%arg0: i32) -> (i32, i32) {
    %c0_i32 = arith.constant 0 : i32
    %c0_i32_0 = arith.constant 0 : i32
    %c0_i32_1 = arith.constant 0 : i32
    return %c0_i32, %c0_i32_0 : i32, i32
  }
  func.func @transform_3(%arg0: i32) -> (i32, i32) {
    %c0_i32 = arith.constant 0 : i32
    %c0_i32_0 = arith.constant 0 : i32
    %c0_i32_1 = arith.constant 0 : i32
    return %c0_i32, %c0_i32_0 : i32, i32
  }
  func.func @transform_4(%arg0: i32) -> (i32, i32) {
    %c0_i32 = arith.constant 0 : i32
    %c0_i32_0 = arith.constant 0 : i32
    %c0_i32_1 = arith.constant 0 : i32
    return %c0_i32, %c0_i32_0 : i32, i32
  }
  func.func @transform_5(%arg0: i32) -> (i32, i32) {
    %c0_i32 = arith.constant 0 : i32
    %c0_i32_0 = arith.constant 0 : i32
    return %arg0, %c0_i32 : i32, i32
  }
}

</mosaic_0001>

<llo_original>
// kernel: tpu_custom_call.1
$region0: #{tpu_custom_call.1}
  #allocation0 [shape = 'u32[]', space=smem, size = 0x4, offset = 0x4, fixed_abs, tag = 'smem constant byte address 0x4 - core index']
  #allocation1 [shape = 'u32[144,128]{1,0:T(1,128)}', space=vmem, size = 0x12000, scoped, tag = 'internal scratch']
  %s0 = inlined_call_operand.hbm [shape: f32[16,32], index: 0, kind: input, shape index: {}]
  %s1 = inlined_call_operand.hbm [shape: f32[32,32], index: 1, kind: input, shape index: {}]
  %s2 = inlined_call_operand.vmem [shape: f32[1,32], index: 2, kind: input, shape index: {}]
  %s3 = inlined_call_operand.hbm [shape: f32[32,32], index: 3, kind: input, shape index: {}]
  %s4 = inlined_call_operand.vmem [shape: f32[1,32], index: 4, kind: input, shape index: {}]
  %s5 = inlined_call_operand.hbm [shape: f32[16,32], index: 5, kind: output, shape index: {}]
  %s6 = sld [smem:[#allocation0]]
  $region65: #{tpu_custom_call.1} parent=0
    _
  %s8 = ssub.s32 1, %s6
  %s9 = scalar_select 0, %s8, %s6
  $region1: #{tpu_custom_call.1} parent=0
    #allocation2 [shape = 'u8[8192]{0}', space=vmem, size = 0x2000, scoped, tag = 'input window, operand 0']
    #allocation3 [shape = 's32[2]{0}', space=sflag, size = 0x8, scoped, tag = 'scoped memory for tpu_custom_call.1']
    #allocation4 [shape = 's32[2]{0}', space=sflag, size = 0x8, scoped, tag = 'scoped memory for tpu_custom_call.1']
    #allocation5 [shape = 'u8[16384]{0}', space=vmem, size = 0x4000, scoped, tag = 'input window, operand 1, single buffered']
    #allocation6 [shape = 's32[1]{0}', space=sflag, size = 0x4, scoped, tag = 'scoped memory for tpu_custom_call.1']
    #allocation7 [shape = 'u8[16384]{0}', space=vmem, size = 0x4000, scoped, tag = 'input window, operand 3, single buffered']
    #allocation8 [shape = 'u8[8192]{0}', space=vmem, size = 0x2000, scoped, tag = 'output window, operand 0']
    %10 = vsyncpa [#allocation3], 0
    %s11 = scalar_lea.sflag [#allocation3], 1
    %12 = vsyncpa %s11, 0
    %13 = vsyncpa [#allocation6], 0
    %14 = vsyncpa [#allocation4], 0
    %s15 = scalar_lea.sflag [#allocation4], 1
    %16 = vsyncpa %s15, 0
    loop: start=0, step=1, limit=4
    $region2: #{tpu_custom_call.1} parent=1 // loop_pre_header
      _
    $region3: #{tpu_custom_call.1} parent=1 // loop_header
      %s18 = sphi 0, %s22
      %p19 = scmp.ge.s32.totalorder %s18, 4
      %s28 = sphi 0, %s30
      %s31 = sphi 0, %s28
      %s32 = sphi 0, %s31
      %s48 = sphi 0, %s32
      %s52 = sphi 0, %s52
      %s54 = sphi 0, %s52
      %s55 = sphi 0, %s54
      %s69 = sphi 0, %s55
      %s73 = sphi 0, %s73
      %s75 = sphi 0, %s73
      %s76 = sphi 0, %s75
      %s90 = sphi 0, %s76
      %s94 = sphi 0, %s94
      %s96 = sphi 0, %s94
      %s97 = sphi 0, %s96
      %s111 = sphi 0, %s97
      %s115 = sphi 0, %s115
      %s117 = sphi 0, %s115
      %s118 = sphi 0, %s117
      %s132 = sphi 0, %s118
      %s138 = sphi 0, %s140
      %s141 = sphi 0, %s138
      %s142 = sphi 0, %s141
      %s158 = sphi 0, %s142
    $region4: #{tpu_custom_call.1} parent=1 // loop_header_branch
      %21 = sbr.rel (%p19) target = $region8
    $region5: #{tpu_custom_call.1} parent=1 // loop_body
      %s23 = ssub.s32 %s18, 1
      %s24 = ssub.s32 %s18, 2
      %s25 = sadd.s32 %s18, 1
      %s26 = ssub.s32 %s18, %s25
      %p27 = scmp.eq.s32.totalorder %s26, 0
      %s29 = sadd.s32 %s28, 1
      %s30 = scalar_select %p27, %s28, %s29
      %p33 = pneg %p27
      %p34 = scmp.eq.s32.totalorder %s18, 1
      %p35 = por %p33, %p34
      %p36 = scmp.ne.s32.totalorder %s28, %s31
      %p37 = scmp.eq.s32.totalorder %s18, 0
      %p38 = por %p36, %p37
      %p39 = scmp.ne.s32.totalorder %s28, %s31
      %p40 = scmp.eq.s32.totalorder %s23, 1
      %p41 = por %p39, %p40
      %p42 = scmp.ne.s32.totalorder %s31, %s32
      %p43 = scmp.eq.s32.totalorder %s23, 0
      %p44 = por %p42, %p43
      %p45 = scmp.ne.s32.totalorder %s31, %s32
      %p46 = scmp.eq.s32.totalorder %s24, 1
      %p47 = por %p45, %p46
      %p49 = scmp.ne.s32.totalorder %s32, %s48
      %p50 = scmp.eq.s32.totalorder %s24, 0
      %p51 = por %p49, %p50
      %s53 = sadd.s32 %s52, 1
      %p56 = scmp.eq.s32.totalorder %s18, 1
      %p57 = scmp.ne.s32.totalorder %s52, %s54
      %p58 = scmp.eq.s32.totalorder %s18, 0
      %p59 = por %p57, %p58
      %p60 = scmp.ne.s32.totalorder %s52, %s54
      %p61 = scmp.eq.s32.totalorder %s23, 1
      %p62 = por %p60, %p61
      %p63 = scmp.ne.s32.totalorder %s54, %s55
      %p64 = scmp.eq.s32.totalorder %s23, 0
      %p65 = por %p63, %p64
      %p66 = scmp.ne.s32.totalorder %s54, %s55
      %p67 = scmp.eq.s32.totalorder %s24, 1
      %p68 = por %p66, %p67
      %p70 = scmp.ne.s32.totalorder %s55, %s69
      %p71 = scmp.eq.s32.totalorder %s24, 0
      %p72 = por %p70, %p71
      %s74 = sadd.s32 %s73, 1
      %p77 = scmp.eq.s32.totalorder %s18, 1
      %p78 = scmp.ne.s32.totalorder %s73, %s75
      %p79 = scmp.eq.s32.totalorder %s18, 0
      %p80 = por %p78, %p79
      %p81 = scmp.ne.s32.totalorder %s73, %s75
      %p82 = scmp.eq.s32.totalorder %s23, 1
      %p83 = por %p81, %p82
      %p84 = scmp.ne.s32.totalorder %s75, %s76
      %p85 = scmp.eq.s32.totalorder %s23, 0
      %p86 = por %p84, %p85
      %p87 = scmp.ne.s32.totalorder %s75, %s76
      %p88 = scmp.eq.s32.totalorder %s24, 1
      %p89 = por %p87, %p88
      %p91 = scmp.ne.s32.totalorder %s76, %s90
      %p92 = scmp.eq.s32.totalorder %s24, 0
      %p93 = por %p91, %p92
      %s95 = sadd.s32 %s94, 1
      %p98 = scmp.eq.s32.totalorder %s18, 1
      %p99 = scmp.ne.s32.totalorder %s94, %s96
      %p100 = scmp.eq.s32.totalorder %s18, 0
      %p101 = por %p99, %p100
      %p102 = scmp.ne.s32.totalorder %s94, %s96
      %p103 = scmp.eq.s32.totalorder %s23, 1
      %p104 = por %p102, %p103
      %p105 = scmp.ne.s32.totalorder %s96, %s97
      %p106 = scmp.eq.s32.totalorder %s23, 0
      %p107 = por %p105, %p106
      %p108 = scmp.ne.s32.totalorder %s96, %s97
      %p109 = scmp.eq.s32.totalorder %s24, 1
      %p110 = por %p108, %p109
      %p112 = scmp.ne.s32.totalorder %s97, %s111
      %p113 = scmp.eq.s32.totalorder %s24, 0
      %p114 = por %p112, %p113
      %s116 = sadd.s32 %s115, 1
      %p119 = scmp.eq.s32.totalorder %s18, 1
      %p120 = scmp.ne.s32.totalorder %s115, %s117
      %p121 = scmp.eq.s32.totalorder %s18, 0
      %p122 = por %p120, %p121
      %p123 = scmp.ne.s32.totalorder %s115, %s117
      %p124 = scmp.eq.s32.totalorder %s23, 1
      %p125 = por %p123, %p124
      %p126 = scmp.ne.s32.totalorder %s117, %s118
      %p127 = scmp.eq.s32.totalorder %s23, 0
      %p128 = por %p126, %p127
      %p129 = scmp.ne.s32.totalorder %s117, %s118
      %p130 = scmp.eq.s32.totalorder %s24, 1
      %p131 = por %p129, %p130
      %p133 = scmp.ne.s32.totalorder %s118, %s132
      %p134 = scmp.eq.s32.totalorder %s24, 0
      %p135 = por %p133, %p134
      %s136 = ssub.s32 %s18, %s25
      %p137 = scmp.eq.s32.totalorder %s136, 0
      %s139 = sadd.s32 %s138, 1
      %s140 = scalar_select %p137, %s138, %s139
      %p143 = pneg %p137
      %p144 = scmp.eq.s32.totalorder %s18, 1
      %p145 = por %p143, %p144
      %p146 = scmp.ne.s32.totalorder %s138, %s141
      %p147 = scmp.eq.s32.totalorder %s18, 0
      %p148 = por %p146, %p147
      %p149 = scmp.ne.s32.totalorder %s138, %s141
      %p150 = scmp.eq.s32.totalorder %s23, 1
      %p151 = por %p149, %p150
      %p152 = scmp.ne.s32.totalorder %s141, %s142
      %p153 = scmp.eq.s32.totalorder %s23, 0
      %p154 = por %p152, %p153
      %p155 = scmp.ne.s32.totalorder %s141, %s142
      %p156 = scmp.eq.s32.totalorder %s24, 1
      %p157 = por %p155, %p156
      %p159 = scmp.ne.s32.totalorder %s142, %s158
      %p160 = scmp.eq.s32.totalorder %s24, 0
      %p161 = por %p159, %p160
      %p162 = scmp.le.s32.totalorder 1, %s18
      %p163 = scmp.lt.s32.totalorder %s18, 3
      %p164 = pnand %p162, %p163
      %p165 = pneg %p164
      // Predicated region
      $region9: #{tpu_custom_call.1} parent=5 // pred_check
        _
      $region10: #{tpu_custom_call.1} parent=5 // pred_check_branch
        %167 = sbr.rel (%p164) target = $region12
      $region11: #{tpu_custom_call.1} parent=5 // pred_region
        %s168 = ssub.s32 %s18, 1
        // Predicated region
        $region13: #{tpu_custom_call.1} parent=11 // pred_check
          %p169 = pneg %p65
        $region14: #{tpu_custom_call.1} parent=11 // pred_check_branch
          %171 = sbr.rel (%p169) target = $region16
        $region15: #{tpu_custom_call.1} parent=11 // pred_region
          %s173 = ssub.s32 512, 512
          %174 = vsyncadd [#allocation6], %s173
          %s175 = sshll.u32 [#allocation5], 4
          %s176 = int_to_ptr.vmem [resolvable:$true] %s175
          %181 = dma.hbm_to_vmem [thread:$0]  %s1, 512, %s176, [#allocation6], 128, 128, 8
        $region16: #{tpu_custom_call.1} parent=11 // pred_fallthru
          _
        // Predicated region
        $region17: #{tpu_custom_call.1} parent=11 // pred_check
          %p182 = pneg %p86
        $region18: #{tpu_custom_call.1} parent=11 // pred_check_branch
          %184 = sbr.rel (%p182) target = $region20
        $region19: #{tpu_custom_call.1} parent=11 // pred_region
          _
        $region20: #{tpu_custom_call.1} parent=11 // pred_fallthru
          _
        // Predicated region
        $region21: #{tpu_custom_call.1} parent=11 // pred_check
          %p185 = pneg %p107
        $region22: #{tpu_custom_call.1} parent=11 // pred_check_branch
          %187 = sbr.rel (%p185) target = $region24
        $region23: #{tpu_custom_call.1} parent=11 // pred_region
          %s189 = ssub.s32 512, 512
          %190 = vsyncadd [#allocation6], %s189
          %s191 = sshll.u32 [#allocation7], 4
          %s192 = int_to_ptr.vmem [resolvable:$true] %s191
          %197 = dma.hbm_to_vmem [thread:$0]  %s3, 512, %s192, [#allocation6], 128, 128, 8
        $region24: #{tpu_custom_call.1} parent=11 // pred_fallthru
          _
        // Predicated region
        $region25: #{tpu_custom_call.1} parent=11 // pred_check
          %p198 = pneg %p128
        $region26: #{tpu_custom_call.1} parent=11 // pred_check_branch
          %200 = sbr.rel (%p198) target = $region28
        $region27: #{tpu_custom_call.1} parent=11 // pred_region
          _
        $region28: #{tpu_custom_call.1} parent=11 // pred_fallthru
          _
      $region12: #{tpu_custom_call.1} parent=5 // pred_fallthru
        _
      %p201 = scmp.lt.s32.totalorder %s18, 2
      // Predicated region
      $region29: #{tpu_custom_call.1} parent=5 // pred_check
        %p202 = pneg %p201
      $region30: #{tpu_custom_call.1} parent=5 // pred_check_branch
        %204 = sbr.rel (%p202) target = $region32
      $region31: #{tpu_custom_call.1} parent=5 // pred_region
        // Predicated region
        $region33: #{tpu_custom_call.1} parent=31 // pred_check
          %p205 = pneg %p38
        $region34: #{tpu_custom_call.1} parent=31 // pred_check_branch
          %207 = sbr.rel (%p205) target = $region36
        $region35: #{tpu_custom_call.1} parent=31 // pred_region
          %s208 = sand.u32 %s28, 1
          %s209 = scalar_lea.sflag [#allocation3], %s208
          %s210 = sand.u32 %s28, 1
          %s211 = smul.addr %s210, 8
          %s212 = scalar_lea.vmem [#allocation2], %s211
          %s214 = ssub.s32 128, 128
          %215 = vsyncadd %s209, %s214
          %s216 = smul.addr %s18, 128
          %s217 = scalar_lea.hbm %s0, %s216
          %s219 = sshll.u32 %s212, 4
          %s220 = int_to_ptr.vmem [resolvable:$true] %s219
          %222 = dma.hbm_to_vmem [thread:$0]  %s217, 128, %s220, %s209
        $region36: #{tpu_custom_call.1} parent=31 // pred_fallthru
          _
      $region32: #{tpu_custom_call.1} parent=5 // pred_fallthru
        _
      %p223 = scmp.le.s32.totalorder 1, %s18
      %p224 = scmp.lt.s32.totalorder %s18, 3
      %p225 = pnand %p223, %p224
      %p226 = pneg %p225
      // Predicated region
      $region37: #{tpu_custom_call.1} parent=5 // pred_check
        _
      $region38: #{tpu_custom_call.1} parent=5 // pred_check_branch
        %228 = sbr.rel (%p225) target = $region40
      $region39: #{tpu_custom_call.1} parent=5 // pred_region
        %s229 = ssub.s32 %s18, 1
        %s230 = sand.u32 %s31, 1
        %s231 = scalar_lea.sflag [#allocation3], %s230
        %s232 = sand.u32 %s31, 1
        %s233 = smul.addr %s232, 8
        %s234 = scalar_lea.vmem [#allocation2], %s233
        // Predicated region
        $region41: #{tpu_custom_call.1} parent=39 // pred_check
          %p235 = pneg %p44
        $region42: #{tpu_custom_call.1} parent=39 // pred_check_branch
          %237 = sbr.rel (%p235) target = $region44
        $region43: #{tpu_custom_call.1} parent=39 // pred_region
          %238 = dma.done %s231, 128
        $region44: #{tpu_custom_call.1} parent=39 // pred_fallthru
          _
        // Predicated region
        $region45: #{tpu_custom_call.1} parent=39 // pred_check
          %p239 = pneg %p65
        $region46: #{tpu_custom_call.1} parent=39 // pred_check_branch
          %241 = sbr.rel (%p239) target = $region48
        $region47: #{tpu_custom_call.1} parent=39 // pred_region
          %242 = dma.done [#allocation6], 512
        $region48: #{tpu_custom_call.1} parent=39 // pred_fallthru
          _
        // Predicated region
        $region49: #{tpu_custom_call.1} parent=39 // pred_check
          %p243 = pneg %p107
        $region50: #{tpu_custom_call.1} parent=39 // pred_check_branch
          %245 = sbr.rel (%p243) target = $region52
        $region51: #{tpu_custom_call.1} parent=39 // pred_region
          %246 = dma.done [#allocation6], 512
        $region52: #{tpu_custom_call.1} parent=39 // pred_fallthru
          _
        %s247 = sand.u32 %s31, 1
        %s248 = scalar_lea.sflag [#allocation3], %s247
        %s249 = sand.u32 %s31, 1
        %s250 = smul.addr %s249, 8
        %s251 = scalar_lea.vmem [#allocation2], %s250
        %p252 = pneg %p44
        %p253 = pneg %p41
        %p254 = pneg %p65
        %p255 = pneg %p62
        %p256 = pneg %p86
        %p257 = pneg %p83
        %p258 = pneg %p107
        %p259 = pneg %p104
        %p260 = pneg %p128
        %p261 = pneg %p125
        %p262 = pneg %p154
        %p263 = pneg %p151
        %s264 = sand.u32 %s141, 1
        %s265 = scalar_lea.sflag [#allocation4], %s264
        %s266 = sand.u32 %s141, 1
        %s267 = smul.addr %s266, 8
        %s268 = scalar_lea.vmem [#allocation8], %s267
        %v269 = vld [vmem:[%s234] sm:$0xff]
        %v270 = vld [vmem:[#allocation5] sm:$0xff]
        %v271 = vld [vmem:[#allocation5 + $0x8] sm:$0xff]
        %v272 = vld [vmem:[#allocation5 + $0x10] sm:$0xff]
        %v273 = vld [vmem:[#allocation5 + $0x18] sm:$0xff]
        %v274 = vld [vmem:[%s2] sm:$0x1]
        %v276 = vlaneseq
        %v277 = vshrl.u32 %v276, 7
        %v278 = vsub.s32 0, %v277
        %v279 = vrot.slane %v274, %v278
        %vm281 = vcmask 261120
        %v283 = vsel %vm281, %v269, 0
        %285 = vmatprep.subr.mxu0 0.0
        %286 = vmatpush1.msra.mxu0 %v270
        %287 = vmatprep.subr.mxu0 0.0
        %288 = vmatpush1.msra.mxu0 %v271
        %289 = vmatprep.subr.mxu0 0.0
        %290 = vmatpush1.msra.mxu0 %v272
        %291 = vmatprep.subr.mxu0 0.0
        %292 = vmatpush1.msra.mxu0 %v273
        %293 = vmatprep.subr.mxu0 0.0
        %294 = vmatpush1.msra.mxu0 0.0
        %295 = vmatprep.subr.mxu0 0.0
        %296 = vmatpush1.msra.mxu0 0.0
        %297 = vmatprep.subr.mxu0 0.0
        %298 = vmatpush1.msra.mxu0 0.0
        %299 = vmatprep.subr.mxu0 0.0
        %300 = vmatpush1.msra.mxu0 0.0
        %301 = vmatprep.subr.mxu0 0.0
        %302 = vmatpush1.msra.mxu0 0.0
        %303 = vmatprep.subr.mxu0 0.0
        %304 = vmatpush1.msra.mxu0 0.0
        %305 = vmatprep.subr.mxu0 0.0
        %306 = vmatpush1.msra.mxu0 0.0
        %307 = vmatprep.subr.mxu0 0.0
        %308 = vmatpush1.msra.mxu0 0.0
        %309 = vmatprep.subr.mxu0 0.0
        %310 = vmatpush1.msra.mxu0 0.0
        %311 = vmatprep.subr.mxu0 0.0
        %312 = vmatpush1.msra.mxu0 0.0
        %313 = vmatprep.subr.mxu0 0.0
        %314 = vmatpush1.msra.mxu0 0.0
        %315 = vmatprep.subr.mxu0 0.0
        %316 = vmatpush1.msra.mxu0 0.0
        %317 = vmatprep.subr.mxu0 0.0
        %318 = vmatpush1.msra.mxu0 0.0
        %319 = vmatprep.subr.mxu0 0.0
        %320 = vmatpush1.msra.mxu0 0.0
        %321 = vmatprep.subr.mxu0 0.0
        %322 = vmatpush1.msra.mxu0 0.0
        %323 = vmatprep.subr.mxu0 0.0
        %324 = vmatpush1.msra.mxu0 0.0
        %325 = vmatprep.subr.mxu0 0.0
        %326 = vmatpush1.msra.mxu0 0.0
        %327 = vmatprep.subr.mxu0 0.0
        %328 = vmatpush1.msra.mxu0 0.0
        %329 = vmatprep.subr.mxu0 0.0
        %330 = vmatpush1.msra.mxu0 0.0
        %331 = vmatprep.subr.mxu0 0.0
        %332 = vmatpush1.msra.mxu0 0.0
        %333 = vmatprep.subr.mxu0 0.0
        %334 = vmatpush1.msra.mxu0 0.0
        %335 = vmatprep.subr.mxu0 0.0
        %336 = vmatpush1.msra.mxu0 0.0
        %337 = vmatprep.subr.mxu0 0.0
        %338 = vmatpush1.msra.mxu0 0.0
        %339 = vmatprep.subr.mxu0 0.0
        %340 = vmatpush1.msra.mxu0 0.0
        %341 = vmatprep.subr.mxu0 0.0
        %342 = vmatpush1.msra.mxu0 0.0
        %343 = vmatprep.subr.mxu0 0.0
        %344 = vmatpush1.msra.mxu0 0.0
        %345 = vmatprep.subr.mxu0 0.0
        %346 = vmatpush1.msra.mxu0 0.0
        %347 = vmatprep.subr.mxu0 0.0
        %348 = vmatpush1.msra.mxu0 0.0
        %349 = vmatprep.mubr.f32.mxu0 0.0
        %350 = vmatmul.mubr.f32.gmra.mrb[0].mxu0 %v283
        %v351 = vpop.f32.mrb[0].mxu0
        %v352 = vadd.f32 %v279, %v351
        %v353 = vpop.f32.mrb[0].mxu0
        %354 = vdwg.mxu0
        %v355 = vmax.f32 %v352, 0.0
        %v356 = vld [vmem:[#allocation7] sm:$0xff]
        %v357 = vld [vmem:[#allocation7 + $0x8] sm:$0xff]
        %v358 = vld [vmem:[#allocation7 + $0x10] sm:$0xff]
        %v359 = vld [vmem:[#allocation7 + $0x18] sm:$0xff]
        %v360 = vld [vmem:[%s4] sm:$0x1]
        %v362 = vlaneseq
        %v363 = vshrl.u32 %v362, 7
        %v364 = vsub.s32 0, %v363
        %v365 = vrot.slane %v360, %v364
        %367 = vmatprep.subr.mxu0 0.0
        %368 = vmatpush1.msra.mxu0 %v356
        %369 = vmatprep.subr.mxu0 0.0
        %370 = vmatpush1.msra.mxu0 %v357
        %371 = vmatprep.subr.mxu0 0.0
        %372 = vmatpush1.msra.mxu0 %v358
        %373 = vmatprep.subr.mxu0 0.0
        %374 = vmatpush1.msra.mxu0 %v359
        %375 = vmatprep.subr.mxu0 0.0
        %376 = vmatpush1.msra.mxu0 0.0
        %377 = vmatprep.subr.mxu0 0.0
        %378 = vmatpush1.msra.mxu0 0.0
        %379 = vmatprep.subr.mxu0 0.0
        %380 = vmatpush1.msra.mxu0 0.0
        %381 = vmatprep.subr.mxu0 0.0
        %382 = vmatpush1.msra.mxu0 0.0
        %383 = vmatprep.subr.mxu0 0.0
        %384 = vmatpush1.msra.mxu0 0.0
        %385 = vmatprep.subr.mxu0 0.0
        %386 = vmatpush1.msra.mxu0 0.0
        %387 = vmatprep.subr.mxu0 0.0
        %388 = vmatpush1.msra.mxu0 0.0
        %389 = vmatprep.subr.mxu0 0.0
        %390 = vmatpush1.msra.mxu0 0.0
        %391 = vmatprep.subr.mxu0 0.0
        %392 = vmatpush1.msra.mxu0 0.0
        %393 = vmatprep.subr.mxu0 0.0
        %394 = vmatpush1.msra.mxu0 0.0
        %395 = vmatprep.subr.mxu0 0.0
        %396 = vmatpush1.msra.mxu0 0.0
        %397 = vmatprep.subr.mxu0 0.0
        %398 = vmatpush1.msra.mxu0 0.0
        %399 = vmatprep.subr.mxu0 0.0
        %400 = vmatpush1.msra.mxu0 0.0
        %401 = vmatprep.subr.mxu0 0.0
        %402 = vmatpush1.msra.mxu0 0.0
        %403 = vmatprep.subr.mxu0 0.0
        %404 = vmatpush1.msra.mxu0 0.0
        %405 = vmatprep.subr.mxu0 0.0
        %406 = vmatpush1.msra.mxu0 0.0
        %407 = vmatprep.subr.mxu0 0.0
        %408 = vmatpush1.msra.mxu0 0.0
        %409 = vmatprep.subr.mxu0 0.0
        %410 = vmatpush1.msra.mxu0 0.0
        %411 = vmatprep.subr.mxu0 0.0
        %412 = vmatpush1.msra.mxu0 0.0
        %413 = vmatprep.subr.mxu0 0.0
        %414 = vmatpush1.msra.mxu0 0.0
        %415 = vmatprep.subr.mxu0 0.0
        %416 = vmatpush1.msra.mxu0 0.0
        %417 = vmatprep.subr.mxu0 0.0
        %418 = vmatpush1.msra.mxu0 0.0
        %419 = vmatprep.subr.mxu0 0.0
        %420 = vmatpush1.msra.mxu0 0.0
        %421 = vmatprep.subr.mxu0 0.0
        %422 = vmatpush1.msra.mxu0 0.0
        %423 = vmatprep.subr.mxu0 0.0
        %424 = vmatpush1.msra.mxu0 0.0
        %425 = vmatprep.subr.mxu0 0.0
        %426 = vmatpush1.msra.mxu0 0.0
        %427 = vmatprep.subr.mxu0 0.0
        %428 = vmatpush1.msra.mxu0 0.0
        %429 = vmatprep.subr.mxu0 0.0
        %430 = vmatpush1.msra.mxu0 0.0
        %431 = vmatprep.mubr.f32.mxu0 0.0
        %432 = vmatmul.mubr.f32.gmra.mrb[0].mxu0 %v283
        %v433 = vpop.f32.mrb[0].mxu0
        %v434 = vadd.f32 %v365, %v433
        %v435 = vpop.f32.mrb[0].mxu0
        %436 = vdwg.mxu0
        %v437 = vxor.u32 %v434, 2147483648
        %v438 = vmul.f32 %v437, 1.442695
        %v439 = vpow.pop %v438
        %v440 = vadd.f32 %v439, 1.0
        %v441 = vrcp.pop %v440
        %v442 = vmul.f32 1.0, %v441
        %v443 = vsub.f32 %v355, %v269
        %v444 = vmul.f32 %v442, %v443
        %v445 = vadd.f32 %v269, %v444
        %446 = vst.msk [vmem:[%s268] sm:$0xff] %vm281, %v445
        %s447 = sand.u32 %s141, 1
        %s448 = scalar_lea.sflag [#allocation4], %s447
        %s449 = sand.u32 %s141, 1
        %s450 = smul.addr %s449, 8
        %s451 = scalar_lea.vmem [#allocation8], %s450
        // Predicated region
        $region53: #{tpu_custom_call.1} parent=39 // pred_check
          %p452 = pneg %p151
        $region54: #{tpu_custom_call.1} parent=39 // pred_check_branch
          %454 = sbr.rel (%p452) target = $region56
        $region55: #{tpu_custom_call.1} parent=39 // pred_region
          %s456 = ssub.s32 128, 128
          %457 = vsyncadd %s448, %s456
          %s458 = smul.addr %s23, 128
          %s459 = scalar_lea.hbm %s5, %s458
          %s461 = sshll.u32 %s451, 4
          %s462 = int_to_ptr.vmem [resolvable:$true] %s461
          %464 = dma.vmem_to_hbm [thread:$0]  %s462, 128, %s459, %s448
        $region56: #{tpu_custom_call.1} parent=39 // pred_fallthru
          _
      $region40: #{tpu_custom_call.1} parent=5 // pred_fallthru
        _
      %p465 = scmp.le.s32.totalorder 2, %s18
      // Predicated region
      $region57: #{tpu_custom_call.1} parent=5 // pred_check
        %p466 = pneg %p465
      $region58: #{tpu_custom_call.1} parent=5 // pred_check_branch
        %468 = sbr.rel (%p466) target = $region60
      $region59: #{tpu_custom_call.1} parent=5 // pred_region
        %s469 = ssub.s32 %s18, 2
        // Predicated region
        $region61: #{tpu_custom_call.1} parent=59 // pred_check
          %p470 = pneg %p157
        $region62: #{tpu_custom_call.1} parent=59 // pred_check_branch
          %472 = sbr.rel (%p470) target = $region64
        $region63: #{tpu_custom_call.1} parent=59 // pred_region
          %s473 = sand.u32 %s142, 1
          %s474 = scalar_lea.sflag [#allocation4], %s473
          %s475 = sand.u32 %s142, 1
          %s476 = smul.addr %s475, 8
          %s477 = scalar_lea.vmem [#allocation8], %s476
          %478 = dma.done %s474, 128
        $region64: #{tpu_custom_call.1} parent=59 // pred_fallthru
          _
      $region60: #{tpu_custom_call.1} parent=5 // pred_fallthru
        _
    $region6: #{tpu_custom_call.1} parent=1 // loop_footer
      %s22 = sadd.s32 1, %s18
    $region7: #{tpu_custom_call.1} parent=1 // loop_footer_branch
      %17 = sbr.rel target = $region3
    $region8: #{tpu_custom_call.1} parent=1 // loop_exit
      _
    %479 = vsyncpa [#allocation3], 1
    %s480 = scalar_lea.sflag [#allocation3], 1
    %481 = vsyncpa %s480, 1
    %482 = vsyncpa [#allocation6], 1
    %483 = vsyncpa [#allocation4], 1
    %s484 = scalar_lea.sflag [#allocation4], 1
    %485 = vsyncpa %s484, 1

</llo_original>
